<compile_context>
chip_gen: v7x
topology: tpu7x:2x2x1
jax: 0.10.0
libtpu: 0.0.40
codegen_flags: <defaults>
</compile_context>

<pallas_src>
from functools import partial

import jax
import jax.numpy as jnp
from jax.experimental import pallas as pl
from jax.experimental.pallas import tpu as pltpu


def _rsoftmax_kernel(x_ref, o_ref, *, radix, cardinality, rchan):
    """x_ref/o_ref: (TB, C) blocks with C = cardinality * radix * rchan.

    Input lane order : [cardinality][radix][rchan]
    Output lane order: [radix][cardinality][rchan]  (== transpose(1,2) + flatten)
    Softmax is taken across the `radix` slices of each cardinality group.
    """
    for c in range(cardinality):
        planes = []
        for r in range(radix):
            lo = (c * radix + r) * rchan
            planes.append(x_ref[:, lo:lo + rchan].astype(jnp.float32))

        # Running max across radix planes (plain VPU elementwise ops).
        m = planes[0]
        for p in planes[1:]:
            m = jnp.maximum(m, p)

        exps = [jnp.exp(p - m) for p in planes]
        s = exps[0]
        for e in exps[1:]:
            s = s + e
        # Exact reciprocal (full-precision EUP path); approx=True was not accurate enough.
        inv = jnp.float32(1.0) / s

        for r in range(radix):
            lo = (r * cardinality + c) * rchan
            o_ref[:, lo:lo + rchan] = (exps[r] * inv).astype(o_ref.dtype)


def _pick_block_batch(batch, row_bytes):
    """Pick the batch-tile TB for (TB, C) blocks.

    Keep double-buffered in+out tiles plus f32 temps (~6x tile bytes) within
    ~8 MiB so the kernel stays under v5e's 16 MiB scoped-VMEM default (v6e/v7x
    have more headroom).  When the whole batch fits in one block but is large,
    split it in two so both v7x TensorCores get a grid step.
    """
    budget = 8 * 1024 * 1024
    tb = budget // (6 * max(int(row_bytes), 1))
    tb = int(max(8, min(512, tb)))
    tb -= tb % 8                       # sublane-aligned when tiling (block < full dim)
    if batch > tb:
        return tb
    if batch >= 16 and batch % 16 == 0:
        return batch // 2              # >= 2 parallel grid steps for the v7x megacore
    return batch                       # block == full dim (always layout-legal)


def rsoftmax(x, radix, cardinality):
    """x: (B, C, 1, 1) or (B, C); returns (B, C) matching the PyTorch forward."""
    # TODO(synk): upstream ResNeSt's rSoftMax applies torch.sigmoid when radix == 1; the
    # given spec always softmaxes (size-1 softmax -> all ones), which this kernel reproduces.
    batch = x.shape[0]
    x2 = x.reshape(batch, -1)                      # (B, C); free reshape (1x1 spatial)
    C = x2.shape[1]
    assert C % (cardinality * radix) == 0
    rchan = C // (cardinality * radix)

    tb = _pick_block_batch(batch, C * x2.dtype.itemsize)

    kernel = partial(_rsoftmax_kernel, radix=radix, cardinality=cardinality, rchan=rchan)
    return pl.pallas_call(
        kernel,
        out_shape=jax.ShapeDtypeStruct((batch, C), x.dtype),
        grid_spec=pltpu.PrefetchScalarGridSpec(
            num_scalar_prefetch=0,
            grid=(pl.cdiv(batch, tb),),
            in_specs=[pl.BlockSpec((tb, C), lambda b: (b, 0))],
            out_specs=pl.BlockSpec((tb, C), lambda b: (b, 0)),
        ),
        compiler_params=pltpu.CompilerParams(
            dimension_semantics=("parallel",),
        ),
    )(x2)


if __name__ == "__main__":
    # rSoftMax has no learnable parameters; only radix / cardinality config.
    radix = 2
    cardinality = 2
    rchan = 8
    batch = 2
    C = cardinality * radix * rchan                # 32

    key = jax.random.PRNGKey(0)
    x = jax.random.normal(key, (batch, C, 1, 1), dtype=jnp.float32)

    y = rsoftmax(x, radix, cardinality)
    y = jax.block_until_ready(y)

    # Pure-JAX reference of the PyTorch forward for a sanity check.
    xr = x.reshape(batch, cardinality, radix, -1)
    xt = jnp.transpose(xr, (0, 2, 1, 3))
    ref = jax.nn.softmax(xt, axis=1).reshape(batch, -1)

    assert y.shape == (batch, C)
    assert jnp.allclose(y, ref, atol=1e-5, rtol=1e-5), float(jnp.max(jnp.abs(y - ref)))
    print("KERNEL_OK")
</pallas_src>

<mosaic_0001>
module attributes {stable_mosaic.version = 11 : i64} {
  func.func @_rsoftmax_kernel(%arg0: i32, %arg1: memref<2x32xf32, #tpu.memory_space<vmem>>, %arg2: memref<2x32xf32, #tpu.memory_space<vmem>>) attributes {dimension_semantics = [#tpu.dimension_semantics<parallel>], iteration_bounds = array<i64: 1>, scalar_prefetch = 0 : i64, scratch_operands = 0 : i64, tpu.core_type = #tpu.core_type<tc>, window_params = [{transform_indices = @transform_0, window_bounds = array<i64: 2, 32>}, {transform_indices = @transform_1, window_bounds = array<i64: 2, 32>}]} {
    %c0 = arith.constant 0 : index
    %c0_0 = arith.constant 0 : index
    %0 = vector.load %arg1[%c0, %c0_0] : memref<2x32xf32, #tpu.memory_space<vmem>>, vector<2x8xf32>
    %c0_1 = arith.constant 0 : index
    %c8 = arith.constant 8 : index
    %1 = vector.load %arg1[%c0_1, %c8] : memref<2x32xf32, #tpu.memory_space<vmem>>, vector<2x8xf32>
    %2 = arith.maximumf %0, %1 : vector<2x8xf32>
    %3 = arith.subf %0, %2 : vector<2x8xf32>
    %4 = math.exp %3 : vector<2x8xf32>
    %5 = arith.subf %1, %2 : vector<2x8xf32>
    %6 = math.exp %5 : vector<2x8xf32>
    %7 = arith.addf %4, %6 : vector<2x8xf32>
    %cst = arith.constant 1.000000e+00 : f32
    %8 = vector.broadcast %cst : f32 to vector<2x8xf32>
    %9 = arith.divf %8, %7 : vector<2x8xf32>
    %10 = arith.mulf %4, %9 : vector<2x8xf32>
    %c0_2 = arith.constant 0 : index
    %c0_3 = arith.constant 0 : index
    %11 = vector.load %arg2[%c0_2, %c0_3] : memref<2x32xf32, #tpu.memory_space<vmem>>, vector<2x8xf32>
    tpu.vector_store %arg2[%c0_2, %c0_3], %10 {strides = array<i32>} : memref<2x32xf32, #tpu.memory_space<vmem>>, vector<2x8xf32>,
    %12 = arith.mulf %6, %9 : vector<2x8xf32>
    %c0_4 = arith.constant 0 : index
    %c16 = arith.constant 16 : index
    %13 = vector.load %arg2[%c0_4, %c16] : memref<2x32xf32, #tpu.memory_space<vmem>>, vector<2x8xf32>
    tpu.vector_store %arg2[%c0_4, %c16], %12 {strides = array<i32>} : memref<2x32xf32, #tpu.memory_space<vmem>>, vector<2x8xf32>,
    %c0_5 = arith.constant 0 : index
    %c16_6 = arith.constant 16 : index
    %14 = vector.load %arg1[%c0_5, %c16_6] : memref<2x32xf32, #tpu.memory_space<vmem>>, vector<2x8xf32>
    %c0_7 = arith.constant 0 : index
    %c24 = arith.constant 24 : index
    %15 = vector.load %arg1[%c0_7, %c24] : memref<2x32xf32, #tpu.memory_space<vmem>>, vector<2x8xf32>
    %16 = arith.maximumf %14, %15 : vector<2x8xf32>
    %17 = arith.subf %14, %16 : vector<2x8xf32>
    %18 = math.exp %17 : vector<2x8xf32>
    %19 = arith.subf %15, %16 : vector<2x8xf32>
    %20 = math.exp %19 : vector<2x8xf32>
    %21 = arith.addf %18, %20 : vector<2x8xf32>
    %cst_8 = arith.constant 1.000000e+00 : f32
    %22 = vector.broadcast %cst_8 : f32 to vector<2x8xf32>
    %23 = arith.divf %22, %21 : vector<2x8xf32>
    %24 = arith.mulf %18, %23 : vector<2x8xf32>
    %c0_9 = arith.constant 0 : index
    %c8_10 = arith.constant 8 : index
    %25 = vector.load %arg2[%c0_9, %c8_10] : memref<2x32xf32, #tpu.memory_space<vmem>>, vector<2x8xf32>
    tpu.vector_store %arg2[%c0_9, %c8_10], %24 {strides = array<i32>} : memref<2x32xf32, #tpu.memory_space<vmem>>, vector<2x8xf32>,
    %26 = arith.mulf %20, %23 : vector<2x8xf32>
    %c0_11 = arith.constant 0 : index
    %c24_12 = arith.constant 24 : index
    %27 = vector.load %arg2[%c0_11, %c24_12] : memref<2x32xf32, #tpu.memory_space<vmem>>, vector<2x8xf32>
    tpu.vector_store %arg2[%c0_11, %c24_12], %26 {strides = array<i32>} : memref<2x32xf32, #tpu.memory_space<vmem>>, vector<2x8xf32>,
    return
  }
  func.func @transform_0(%arg0: i32) -> (i32, i32) {
    %c0_i32 = arith.constant 0 : i32
    %c0_i32_0 = arith.constant 0 : i32
    return %arg0, %c0_i32 : i32, i32
  }
  func.func @transform_1(%arg0: i32) -> (i32, i32) {
    %c0_i32 = arith.constant 0 : i32
    %c0_i32_0 = arith.constant 0 : i32
    return %arg0, %c0_i32 : i32, i32
  }
}

</mosaic_0001>

<llo_original>
// kernel: tpu_custom_call.1
$region0: #{tpu_custom_call.1}
  #allocation0 [shape = 'u32[]', space=smem, size = 0x4, offset = 0x4, fixed_abs, tag = 'smem constant byte address 0x4 - core index']
  #allocation1 [shape = 'u32[144,128]{1,0:T(1,128)}', space=vmem, size = 0x12000, scoped, tag = 'internal scratch']
  %s0 = inlined_call_operand.hbm [shape: f32[2,32], index: 0, kind: input, shape index: {}]
  %s1 = inlined_call_operand.hbm [shape: f32[2,32], index: 1, kind: output, shape index: {}]
  %s2 = sld [smem:[#allocation0]]
  $region18: #{tpu_custom_call.1} parent=0
    _
  %s4 = ssub.s32 1, %s2
  %s5 = scalar_select 0, %s4, %s2
  $region1: #{tpu_custom_call.1} parent=0
    #allocation2 [shape = 'u8[1024]{0}', space=vmem, size = 0x400, scoped, tag = 'input window, operand 0, single buffered']
    #allocation3 [shape = 's32[1]{0}', space=sflag, size = 0x4, scoped, tag = 'scoped memory for tpu_custom_call.1']
    #allocation4 [shape = 's32[1]{0}', space=sflag, size = 0x4, scoped, tag = 'scoped memory for tpu_custom_call.1']
    #allocation5 [shape = 'u8[1024]{0}', space=vmem, size = 0x400, scoped, tag = 'output window, operand 0, single buffered']
    %6 = vsyncpa [#allocation3], 0
    %7 = vsyncpa [#allocation4], 0
    // Predicated region
    $region2: #{tpu_custom_call.1} parent=1 // pred_check
      _
    $region3: #{tpu_custom_call.1} parent=1 // pred_check_branch
      %9 = sbr.rel (0) target = $region5
    $region4: #{tpu_custom_call.1} parent=1 // pred_region
      %s11 = ssub.s32 32, 32
      %12 = vsyncadd [#allocation3], %s11
      %s14 = sshll.u32 [#allocation2], 4
      %s15 = int_to_ptr.vmem [resolvable:$true] %s14
      %17 = dma.hbm_to_vmem [thread:$0]  %s0, 32, %s15, [#allocation3]
    $region5: #{tpu_custom_call.1} parent=1 // pred_fallthru
      _
    // Predicated region
    $region6: #{tpu_custom_call.1} parent=1 // pred_check
      _
    $region7: #{tpu_custom_call.1} parent=1 // pred_check_branch
      %19 = sbr.rel (0) target = $region9
    $region8: #{tpu_custom_call.1} parent=1 // pred_region
      %20 = dma.done [#allocation3], 32
    $region9: #{tpu_custom_call.1} parent=1 // pred_fallthru
      _
    %v21 = vld [vmem:[#allocation2] sm:$0x3]
    %23 = vrot.lane.b32.xlu0 %v21, 120
    %v24 = vpop.permute.xlu0 %23
    %v26 = vmax.f32 %v21, %v24
    %v27 = vsub.f32 %v21, %v26
    %v28 = vmul.f32 %v27, 1.442695
    %v29 = vpow.pop %v28
    %31 = vrot.lane.b32.xlu0 %v26, 8
    %v32 = vpop.permute.xlu0 %31
    %v34 = vsub.f32 %v21, %v32
    %v35 = vmul.f32 %v34, 1.442695
    %v36 = vpow.pop %v35
    %38 = vrot.lane.b32.xlu0 %v36, 120
    %v39 = vpop.permute.xlu0 %38
    %v41 = vadd.f32 %v29, %v39
    %v42 = vrcp.pop %v41
    %v43 = vmul.f32 1.0, %v42
    %v44 = vmul.f32 %v29, %v43
    %vm45 = vcmask 58368
    %46 = vst.msk [vmem:[#allocation5] sm:$0x3] %vm45, %v44
    %48 = vrot.lane.b32.xlu0 %v43, 8
    %v49 = vpop.permute.xlu0 %48
    %v51 = vmul.f32 %v36, %v49
    %53 = vrot.lane.b32.xlu0 %v51, 8
    %v54 = vpop.permute.xlu0 %53
    %vm56 = vcmask 189568
    %57 = vst.msk [vmem:[#allocation5] sm:$0x3] %vm56, %v54
    %v58 = vld [vmem:[#allocation2] sm:$0x3]
    %60 = vrot.lane.b32.xlu0 %v58, 120
    %v61 = vpop.permute.xlu0 %60
    %v63 = vmax.f32 %v58, %v61
    %v64 = vsub.f32 %v58, %v63
    %v65 = vmul.f32 %v64, 1.442695
    %v66 = vpow.pop %v65
    %68 = vrot.lane.b32.xlu0 %v63, 8
    %v69 = vpop.permute.xlu0 %68
    %v71 = vsub.f32 %v58, %v69
    %v72 = vmul.f32 %v71, 1.442695
    %v73 = vpow.pop %v72
    %75 = vrot.lane.b32.xlu0 %v73, 120
    %v76 = vpop.permute.xlu0 %75
    %v78 = vadd.f32 %v66, %v76
    %v79 = vrcp.pop %v78
    %v80 = vmul.f32 1.0, %v79
    %v81 = vmul.f32 %v66, %v80
    %83 = vrot.lane.b32.xlu0 %v81, 120
    %v84 = vpop.permute.xlu0 %83
    %vm86 = vcmask 123968
    %87 = vst.msk [vmem:[#allocation5] sm:$0x3] %vm86, %v84
    %89 = vrot.lane.b32.xlu0 %v80, 8
    %v90 = vpop.permute.xlu0 %89
    %v92 = vmul.f32 %v73, %v90
    %vm93 = vcmask 255168
    %94 = vst.msk [vmem:[#allocation5] sm:$0x3] %vm93, %v92
    // Predicated region
    $region10: #{tpu_custom_call.1} parent=1 // pred_check
      _
    $region11: #{tpu_custom_call.1} parent=1 // pred_check_branch
      %96 = sbr.rel (0) target = $region13
    $region12: #{tpu_custom_call.1} parent=1 // pred_region
      %s98 = ssub.s32 32, 32
      %99 = vsyncadd [#allocation4], %s98
      %s101 = sshll.u32 [#allocation5], 4
      %s102 = int_to_ptr.vmem [resolvable:$true] %s101
      %104 = dma.vmem_to_hbm [thread:$0]  %s102, 32, %s1, [#allocation4]
    $region13: #{tpu_custom_call.1} parent=1 // pred_fallthru
      _
    // Predicated region
    $region14: #{tpu_custom_call.1} parent=1 // pred_check
      _
    $region15: #{tpu_custom_call.1} parent=1 // pred_check_branch
      %106 = sbr.rel (0) target = $region17
    $region16: #{tpu_custom_call.1} parent=1 // pred_region
      %107 = dma.done [#allocation4], 32
    $region17: #{tpu_custom_call.1} parent=1 // pred_fallthru
      _
    %108 = vsyncpa [#allocation3], 1
    %109 = vsyncpa [#allocation4], 1

</llo_original>
